<compile_context>
chip_gen: v5e
topology: v5e:2x2
jax: 0.10.0
libtpu: 0.0.40
codegen_flags: <defaults>
</compile_context>

<pallas_src>
import jax
import jax.numpy as jnp
from jax.experimental import pallas as pl
from jax.experimental.pallas import tpu as pltpu

LANE_WIDTH = 512  # lane-dense slab width (multiple of 128 -> unmasked vst)


def _round_up(a, b):
    return ((a + b - 1) // b) * b


def _sublane_multiple(dtype):
    # f32 -> 8, bf16/f16 -> 16, int8/fp8 -> 32 (sub-32-bit packs along sublanes).
    return max(8, 32 // jnp.dtype(dtype).itemsize)


def _device_kind():
    try:
        return jax.devices()[0].device_kind.lower()
    except Exception:
        return ""


def _target_block_bytes(kind):
    # v5e: 16 MiB scoped-VMEM default -> keep each buffer <= 2 MiB.
    # v6e/v7x: 32 MiB scoped default -> ~4 MiB buffers; 2 bufs x (in+out)
    # = 16 MiB pipelined VMEM, comfortably inside the default.
    if ("v6" in kind) or ("v7" in kind):
        return 4 << 20
    return 2 << 20


def _sinegmoid_kernel(delta_ref, x_ref, o_ref):
    # delta_ref: SMEM (2,) float32 -> [delta1, delta2] (scalar-prefetched).
    d1 = delta_ref[0]
    d2 = delta_ref[1]
    # Native-dtype HBM I/O; compute in f32 in-register (v5e has no bf16 VPU/EUP).
    x = x_ref[...].astype(jnp.float32)
    # sigmoid(z) = 0.5 * (tanh(z/2) + 1): one EUP transcendental, no divide.
    sig = 0.5 * (jnp.tanh((0.5 * d2) * x) + 1.0)
    o_ref[...] = (jnp.sin(d1 * x) * sig).astype(o_ref.dtype)


def _sinegmoid_jnp(x, d1, d2):
    xf = x.astype(jnp.float32)
    return (jnp.sin(d1 * xf) * jax.nn.sigmoid(d2 * xf)).astype(x.dtype)


@jax.jit
def sinegmoid(x, delta1, delta2):
    """Elementwise sin(delta1*x)*sigmoid(delta2*x) via a Pallas TPU kernel.

    Accepts any shape / float dtype (NCHW in the reference module) and
    returns the same shape/dtype, matching PyTorch's elementwise semantics.
    """
    orig_shape = x.shape
    dtype = x.dtype
    itemsize = jnp.dtype(dtype).itemsize
    sub = _sublane_multiple(dtype)
    kind = _device_kind()

    deltas = jnp.array([delta1, delta2], dtype=jnp.float32)
    d1, d2 = deltas[0], deltas[1]

    xf = x.reshape(-1)
    n = xf.shape[0]

    rows = n // LANE_WIDTH          # full lane-dense rows -> Pallas kernel
    n_main = rows * LANE_WIDTH
    n_tail = n - n_main             # ragged (< LANE_WIDTH) tail -> plain jnp

    if rows == 0:
        # Tiny input: the Pallas launch would be pure overhead.
        return _sinegmoid_jnp(xf, d1, d2).reshape(orig_shape)

    # ---- block sizing (no padding: ragged last grid block is masked) ----
    target_rows = _target_block_bytes(kind) // (LANE_WIDTH * itemsize)
    target_rows = max(sub, (target_rows // sub) * sub)
    if rows <= sub:
        row_tile = rows                               # block == full array dims
    else:
        row_tile = min(target_rows, _round_up(rows, sub))
        if pl.cdiv(rows, row_tile) < 2:
            # >= 2 grid steps so "parallel" can shard across v7x's 2 TCs.
            row_tile = _round_up(pl.cdiv(rows, 2), sub)
    grid = (pl.cdiv(rows, row_tile),)

    x2d = xf[:n_main].reshape(rows, LANE_WIDTH)

    block = (row_tile, LANE_WIDTH)
    index_map = lambda i, _deltas: (i, 0)             # prefetch ref is positional
    in_spec = pl.BlockSpec(block, index_map)
    if "v7" in kind and hasattr(pl, "Buffered"):
        try:  # deeper input pipelining only where step compute is very short
            in_spec = pl.BlockSpec(block, index_map, pipeline_mode=pl.Buffered(3))
        except TypeError:
            in_spec = pl.BlockSpec(block, index_map)

    out2d = pl.pallas_call(
        _sinegmoid_kernel,
        out_shape=jax.ShapeDtypeStruct((rows, LANE_WIDTH), dtype),
        grid_spec=pltpu.PrefetchScalarGridSpec(
            num_scalar_prefetch=1,                    # deltas land in SMEM
            grid=grid,
            in_specs=[in_spec],
            out_specs=pl.BlockSpec(block, index_map),
        ),
        compiler_params=pltpu.CompilerParams(
            dimension_semantics=("parallel",),
        ),
        cost_estimate=pl.CostEstimate(
            flops=8 * n_main,
            transcendentals=2 * n_main,
            bytes_accessed=2 * n_main * itemsize,
        ),
    )(deltas, x2d)

    y_main = out2d.reshape(-1)
    if n_tail:
        y_tail = _sinegmoid_jnp(xf[n_main:], d1, d2)
        return jnp.concatenate([y_main, y_tail]).reshape(orig_shape)
    return y_main.reshape(orig_shape)


if __name__ == "__main__":
    key = jax.random.PRNGKey(0)
    # Module init parameters (deterministic, synthetic).
    delta1 = 1.5
    delta2 = 0.7

    # Small NCHW input consistent with the conv-style usage in the module.
    x = jax.random.normal(key, (2, 4, 16, 16), dtype=jnp.float32)
    y = jax.block_until_ready(sinegmoid(x, delta1, delta2))
    y_ref = jnp.sin(delta1 * x) * jax.nn.sigmoid(delta2 * x)
    assert y.shape == x.shape and y.dtype == x.dtype
    assert jnp.allclose(y, y_ref, atol=1e-5, rtol=1e-5)

    # Unaligned size: exercises the ragged last block + jnp tail path.
    x1 = jax.random.normal(jax.random.PRNGKey(1), (3, 5, 17, 13),
                           dtype=jnp.float32)
    y1 = jax.block_until_ready(sinegmoid(x1, delta1, delta2))
    y1_ref = jnp.sin(delta1 * x1) * jax.nn.sigmoid(delta2 * x1)
    assert jnp.allclose(y1, y1_ref, atol=1e-5, rtol=1e-5)

    # Moderate size: exercises the multi-block (>= 2 step) grid path.
    x2 = jax.random.normal(jax.random.PRNGKey(2), (4, 8, 128, 128),
                           dtype=jnp.float32)
    y2 = jax.block_until_ready(sinegmoid(x2, delta1, delta2))
    y2_ref = jnp.sin(delta1 * x2) * jax.nn.sigmoid(delta2 * x2)
    assert jnp.allclose(y2, y2_ref, atol=1e-5, rtol=1e-5)

    # bf16 I/O: exercises dtype-aware sublane rounding (16) with f32 math.
    x3 = jax.random.normal(jax.random.PRNGKey(3), (2, 3, 40, 40),
                           dtype=jnp.float32).astype(jnp.bfloat16)
    y3 = jax.block_until_ready(sinegmoid(x3, delta1, delta2))
    x3f = x3.astype(jnp.float32)
    y3_ref = jnp.sin(delta1 * x3f) * jax.nn.sigmoid(delta2 * x3f)
    assert y3.dtype == jnp.bfloat16
    assert jnp.allclose(y3.astype(jnp.float32), y3_ref, atol=2e-2, rtol=2e-2)

    print("KERNEL_OK")
</pallas_src>

<mosaic_0001>
module attributes {stable_mosaic.version = 11 : i64} {
  func.func @_sinegmoid_kernel(%arg0: i32, %arg1: memref<2xf32, #tpu.memory_space<smem>>, %arg2: memref<4x512xf32, #tpu.memory_space<vmem>>, %arg3: memref<4x512xf32, #tpu.memory_space<vmem>>) attributes {dimension_semantics = [#tpu.dimension_semantics<parallel>], iteration_bounds = array<i64: 1>, scalar_prefetch = 1 : i64, scratch_operands = 0 : i64, tpu.core_type = #tpu.core_type<tc>, window_params = [{transform_indices = @transform_0, window_bounds = array<i64: 4, 512>}, {transform_indices = @transform_1, window_bounds = array<i64: 4, 512>}]} {
    %c0 = arith.constant 0 : index
    %0 = memref.load %arg1[%c0] : memref<2xf32, #tpu.memory_space<smem>>
    %c1 = arith.constant 1 : index
    %1 = memref.load %arg1[%c1] : memref<2xf32, #tpu.memory_space<smem>>
    %c0_0 = arith.constant 0 : index
    %c0_1 = arith.constant 0 : index
    %2 = vector.load %arg2[%c0_0, %c0_1] : memref<4x512xf32, #tpu.memory_space<vmem>>, vector<4x512xf32>
    %cst = arith.constant 5.000000e-01 : f32
    %3 = arith.mulf %cst, %1 : f32
    %4 = vector.broadcast %3 : f32 to vector<4x512xf32>
    %5 = arith.mulf %4, %2 : vector<4x512xf32>
    %6 = math.tanh %5 : vector<4x512xf32>
    %cst_2 = arith.constant 1.000000e+00 : f32
    %7 = vector.broadcast %cst_2 : f32 to vector<4x512xf32>
    %8 = arith.addf %6, %7 : vector<4x512xf32>
    %cst_3 = arith.constant 5.000000e-01 : f32
    %9 = vector.broadcast %cst_3 : f32 to vector<4x512xf32>
    %10 = arith.mulf %9, %8 : vector<4x512xf32>
    %11 = vector.broadcast %0 : f32 to vector<4x512xf32>
    %12 = arith.mulf %11, %2 : vector<4x512xf32>
    %13 = math.sin %12 : vector<4x512xf32>
    %14 = arith.mulf %13, %10 : vector<4x512xf32>
    %c0_4 = arith.constant 0 : index
    %c0_5 = arith.constant 0 : index
    %15 = vector.load %arg3[%c0_4, %c0_5] : memref<4x512xf32, #tpu.memory_space<vmem>>, vector<4x512xf32>
    tpu.vector_store %arg3[%c0_4, %c0_5], %14 {strides = array<i32>} : memref<4x512xf32, #tpu.memory_space<vmem>>, vector<4x512xf32>,
    return
  }
  func.func @transform_0(%arg0: i32, %arg1: memref<2xf32, #tpu.memory_space<smem>>) -> (i32, i32) {
    %c0_i32 = arith.constant 0 : i32
    %c0_i32_0 = arith.constant 0 : i32
    return %arg0, %c0_i32 : i32, i32
  }
  func.func @transform_1(%arg0: i32, %arg1: memref<2xf32, #tpu.memory_space<smem>>) -> (i32, i32) {
    %c0_i32 = arith.constant 0 : i32
    %c0_i32_0 = arith.constant 0 : i32
    return %arg0, %c0_i32 : i32, i32
  }
}

</mosaic_0001>

<llo_original>
// kernel: sinegmoid.1
$region0: #{sinegmoid.1}
  #allocation0 [shape = 'u32[]', space=smem, size = 0x4, offset = 0x4, fixed_abs, tag = 'smem constant byte address 0x4 - core index']
  #allocation1 [shape = 'u32[72,128]{1,0:T(1,128)}', space=vmem, size = 0x9000, scoped, tag = 'internal scratch']
  #allocation2 [shape = 's32[1]{0}', space=sflag, size = 0x4, scoped, tag = 'scoped memory for sinegmoid.1']
  #allocation3 [shape = 'u8[512]{0}', space=smem, size = 0x200, scoped, tag = 'prefetched SMEM operand 0']
  %s0 = inlined_call_operand.vmem [shape: f32[2], index: 0, kind: input, shape index: {}]
  %s1 = inlined_call_operand.vmem [shape: f32[4,512], index: 1, kind: input, shape index: {}]
  %s2 = inlined_call_operand.vmem [shape: f32[4,512], index: 2, kind: output, shape index: {}]
  %s3 = sld [smem:[#allocation0]]
  $region14: #{sinegmoid.1} parent=0
    _
  %s5 = ssub.s32 1, %s3
  %s6 = scalar_select 0, %s5, %s3
  %s8 = sshll.u32 %s0, 4
  %s9 = int_to_ptr.vmem [resolvable:$true] %s8
  %11 = dma.vmem_to_smem %s9, 16, [#allocation3], [#allocation2]
  %13 = dma.done [#allocation2], 16
  %14 = sfence
  // Predicated region
  $region2: #{sinegmoid.1} parent=0 // pred_check
    _
  $region3: #{sinegmoid.1} parent=0 // pred_check_branch
    %16 = sbr.rel (0) target = $region5
  $region4: #{sinegmoid.1} parent=0 // pred_region
    _
  $region5: #{sinegmoid.1} parent=0 // pred_fallthru
    _
  %s17 = sld [smem:[#allocation3]]
  %s18 = sld [smem:[#allocation3 + $0x1]]
  %v19 = vld [vmem:[%s1] sm:$0xff]
  %v20 = vld [vmem:[%s1 + $0x8] sm:$0xff]
  %s21 = smul.f32 %s18, 0.5
  %v22 = vstv %s21
  %v23 = vmul.f32 %v22, %v19
  %v24 = vmul.f32 %v22, %v20
  %v25 = vtanh.pop %v23
  %v26 = vtanh.pop %v24
  %v27 = vadd.f32 %v25, 1.0
  %v28 = vadd.f32 %v26, 1.0
  %v29 = vmul.f32 %v27, 0.5
  %v30 = vmul.f32 %v28, 0.5
  %v31 = vstv %s17
  %v32 = vmul.f32 %v31, %v19
  %v33 = vmul.f32 %v31, %v20
  %v34 = vand.u32 2147483647, %v32
  %vm35 = vcmp.le.f32.partialorder %v34, 0.7853982
  %vm36 = vcmp.lt.s32.totalorder %v32, 0
  %v37 = vand.u32 %v32, 2139095040
  %v38 = vshrl.u32 %v37, 23
  %v39 = vsub.s32 %v38, 127
  %v40 = vand.u32 2147483647, %v32
  %v41 = vand.u32 %v40, 8388607
  %v42 = vor.u32 %v41, 8388608
  %v43 = vsub.s32 0, %v42
  %v44 = vadd.s32 %v39, 1
  %vm45 = vcmp.gt.s32.totalorder %v44, 0
  %v46 = vsel %vm45, %v44, 0
  %v47 = vshrl.u32 %v46, 5
  %v48 = vand.u32 %v46, 31
  %v49 = vsub.s32 32, %v48
  %v50 = vshrl.u32 683565275, %v49
  %v51 = vshll.u32 683565275, %v48
  %v52 = vshrl.u32 2475754826, %v49
  %v53 = vor.u32 %v51, %v52
  %v54 = vshll.u32 2475754826, %v48
  %v55 = vshrl.u32 2131351028, %v49
  %v56 = vor.u32 %v54, %v55
  %v57 = vshll.u32 2131351028, %v48
  %v58 = vshrl.u32 2102212464, %v49
  %v59 = vor.u32 %v57, %v58
  %v60 = vshll.u32 2102212464, %v48
  %v61 = vshrl.u32 920167782, %v49
  %v62 = vor.u32 %v60, %v61
  %v63 = vshll.u32 920167782, %v48
  %v64 = vshrl.u32 1326507024, %v49
  %v65 = vor.u32 %v63, %v64
  %vm66 = vcmp.lt.s32.totalorder %v47, 1
  %vm67 = vcmp.lt.s32.totalorder %v47, 2
  %vm68 = vcmp.lt.s32.totalorder %v47, 3
  %vm69 = vcmp.lt.s32.totalorder %v47, 4
  %v70 = vsel %vm66, %v50, %v53
  %v71 = vsel %vm69, %v59, 2102212464
  %v72 = vsel %vm68, %v56, %v71
  %v73 = vsel %vm67, %v70, %v72
  %v74 = vsel %vm66, %v53, %v56
  %v75 = vsel %vm69, %v62, 920167782
  %v76 = vsel %vm68, %v59, %v75
  %v77 = vsel %vm67, %v74, %v76
  %v78 = vsel %vm66, %v56, %v59
  %v79 = vsel %vm69, %v65, 1326507024
  %v80 = vsel %vm68, %v62, %v79
  %v81 = vsel %vm67, %v78, %v80
  %v82 = vshll.u32 %v42, 8
  %v83 = vand.u32 %v82, 65535
  %v84 = vshrl.u32 %v82, 16
  %v85 = vand.u32 %v81, 65535
  %v86 = vshrl.u32 %v81, 16
  %v87 = vmul.u32 %v83, %v85
  %v88 = vmul.u32 %v83, %v86
  %v89 = vmul.u32 %v84, %v85
  %v90 = vmul.u32 %v84, %v86
  %v91 = vshll.u32 %v88, 16
  %v92 = vshrl.u32 %v88, 16
  %v93 = vshll.u32 %v89, 16
  %v94 = vshrl.u32 %v89, 16
  %vm95 = vc.u32 %v87, %v91
  %v96 = vsel %vm95, 1, 0
  %v97 = vadd.s32 %v87, %v91
  %v98 = vadd.s32 %v90, %v96
  %vm99 = vc.u32 %v97, %v93
  %v100 = vsel %vm99, 1, 0
  %v101 = vadd.s32 %v97, %v93
  %v102 = vadd.s32 %v98, %v100
  %v103 = vadd.s32 %v102, %v92
  %v104 = vadd.s32 %v103, %v94
  %v105 = vand.u32 %v82, 65535
  %v106 = vshrl.u32 %v82, 16
  %v107 = vand.u32 %v77, 65535
  %v108 = vshrl.u32 %v77, 16
  %v109 = vmul.u32 %v105, %v107
  %v110 = vmul.u32 %v105, %v108
  %v111 = vmul.u32 %v106, %v107
  %v112 = vmul.u32 %v106, %v108
  %v113 = vshll.u32 %v110, 16
  %v114 = vshrl.u32 %v110, 16
  %v115 = vshll.u32 %v111, 16
  %v116 = vshrl.u32 %v111, 16
  %vm117 = vc.u32 %v109, %v113
  %v118 = vsel %vm117, 1, 0
  %v119 = vadd.s32 %v109, %v113
  %v120 = vadd.s32 %v112, %v118
  %vm121 = vc.u32 %v119, %v115
  %v122 = vsel %vm121, 1, 0
  %v123 = vadd.s32 %v119, %v115
  %v124 = vadd.s32 %v120, %v122
  %v125 = vadd.s32 %v124, %v114
  %v126 = vadd.s32 %v125, %v116
  %v127 = vmul.u32 %v82, %v73
  %v128 = vadd.s32 %v104, %v123
  %vm129 = vc.u32 %v104, %v123
  %v130 = vadd.s32 %v126, 1
  %v131 = vsel %vm129, %v130, %v126
  %v132 = vadd.s32 %v127, %v131
  %v133 = vadd.s32 %v132, 536870912
  %v134 = vshrl.u32 %v133, 30
  %v135 = vshll.u32 %v134, 30
  %v136 = vsub.s32 %v132, %v135
  %vm137 = vcmp.lt.s32.totalorder %v136, 0
  %v138 = vsub.s32 0, %v136
  %v139 = vsel %vm137, %v138, %v136
  %v140 = vclz %v139
  %v141 = vsub.s32 %v140, 2
  %vm142 = vcmp.gt.s32.totalorder 0, %v141
  %v143 = vsel %vm142, 0, %v141
  %v144 = vsub.s32 32, %v143
  %v145 = vshll.u32 %v136, %v143
  %v146 = vshrl.u32 %v128, %v144
  %v147 = vor.u32 %v145, %v146
  %v148 = vsub.s32 4294967266, %v143
  %v149 = vadd.s32 %v148, 127
  %v150 = vshll.u32 %v149, 23
  %v151 = vor.u32 4788187, %v150
  %v152 = vand.u32 2147483647, %v151
  %v154 = vcvt.s32.f32 %v147
  %v155 = vmul.f32 %v154, %v152
  %v156 = vxor.u32 %v155, 2147483648
  %v157 = vsel %vm36, %v156, %v155
  %v158 = vsub.s32 4, %v134
  %v159 = vsel %vm36, %v158, %v134
  %v160 = vsel %vm35, %v32, %v157
  %v161 = vsel %vm35, 0, %v159
  %v162 = vmul.f32 %v160, %v160
  %v163 = vmul.f32 %v162, -0.001358992
  %v164 = vadd.f32 %v163, 0.041655596
  %v165 = vmul.f32 %v162, %v164
  %v166 = vadd.f32 %v165, -0.4999988
  %v167 = vmul.f32 %v162, %v166
  %v168 = vadd.f32 1.0, %v167
  %v169 = vmul.f32 %v160, %v160
  %v170 = vmul.f32 %v169, -0.00019511016
  %v171 = vadd.f32 %v170, 0.008332121
  %v172 = vmul.f32 %v169, %v171
  %v173 = vadd.f32 %v172, -0.16666654
  %v174 = vmul.f32 %v169, %v173
  %v175 = vadd.f32 %v174, 1.0
  %v176 = vmul.f32 %v175, %v160
  %vm177 = vweird.f32 %v32
  %v178 = vadd.s32 %v161, 3
  %v179 = vand.u32 %v178, 3
  %vm180 = vcmp.lt.s32.totalorder %v179, 2
  %vm181 = vcmp.eq.s32.totalorder %v179, 0
  %v182 = vxor.u32 %v176, 2147483648
  %v183 = vsel %vm181, %v168, %v182
  %vm184 = vcmp.eq.s32.totalorder %v179, 2
  %v185 = vxor.u32 %v168, 2147483648
  %v186 = vsel %vm184, %v185, %v176
  %v187 = vsel %vm180, %v183, %v186
  %v188 = vsel %vm177, nan, %v187
  %v189 = vand.u32 2147483647, %v33
  %vm190 = vcmp.le.f32.partialorder %v189, 0.7853982
  %vm191 = vcmp.lt.s32.totalorder %v33, 0
  %v192 = vand.u32 %v33, 2139095040
  %v193 = vshrl.u32 %v192, 23
  %v194 = vsub.s32 %v193, 127
  %v195 = vand.u32 2147483647, %v33
  %v196 = vand.u32 %v195, 8388607
  %v197 = vor.u32 %v196, 8388608
  %v198 = vsub.s32 0, %v197
  %v199 = vadd.s32 %v194, 1
  %vm200 = vcmp.gt.s32.totalorder %v199, 0
  %v201 = vsel %vm200, %v199, 0
  %v202 = vshrl.u32 %v201, 5
  %v203 = vand.u32 %v201, 31
  %v204 = vsub.s32 32, %v203
  %v205 = vshrl.u32 683565275, %v204
  %v206 = vshll.u32 683565275, %v203
  %v207 = vshrl.u32 2475754826, %v204
  %v208 = vor.u32 %v206, %v207
  %v209 = vshll.u32 2475754826, %v203
  %v210 = vshrl.u32 2131351028, %v204
  %v211 = vor.u32 %v209, %v210
  %v212 = vshll.u32 2131351028, %v203
  %v213 = vshrl.u32 2102212464, %v204
  %v214 = vor.u32 %v212, %v213
  %v215 = vshll.u32 2102212464, %v203
  %v216 = vshrl.u32 920167782, %v204
  %v217 = vor.u32 %v215, %v216
  %v218 = vshll.u32 920167782, %v203
  %v219 = vshrl.u32 1326507024, %v204
  %v220 = vor.u32 %v218, %v219
  %vm221 = vcmp.lt.s32.totalorder %v202, 1
  %vm222 = vcmp.lt.s32.totalorder %v202, 2
  %vm223 = vcmp.lt.s32.totalorder %v202, 3
  %vm224 = vcmp.lt.s32.totalorder %v202, 4
  %v225 = vsel %vm221, %v205, %v208
  %v226 = vsel %vm224, %v214, 2102212464
  %v227 = vsel %vm223, %v211, %v226
  %v228 = vsel %vm222, %v225, %v227
  %v229 = vsel %vm221, %v208, %v211
  %v230 = vsel %vm224, %v217, 920167782
  %v231 = vsel %vm223, %v214, %v230
  %v232 = vsel %vm222, %v229, %v231
  %v233 = vsel %vm221, %v211, %v214
  %v234 = vsel %vm224, %v220, 1326507024
  %v235 = vsel %vm223, %v217, %v234
  %v236 = vsel %vm222, %v233, %v235
  %v237 = vshll.u32 %v197, 8
  %v238 = vand.u32 %v237, 65535
  %v239 = vshrl.u32 %v237, 16
  %v240 = vand.u32 %v236, 65535
  %v241 = vshrl.u32 %v236, 16
  %v242 = vmul.u32 %v238, %v240
  %v243 = vmul.u32 %v238, %v241
  %v244 = vmul.u32 %v239, %v240
  %v245 = vmul.u32 %v239, %v241
  %v246 = vshll.u32 %v243, 16
  %v247 = vshrl.u32 %v243, 16
  %v248 = vshll.u32 %v244, 16
  %v249 = vshrl.u32 %v244, 16
  %vm250 = vc.u32 %v242, %v246
  %v251 = vsel %vm250, 1, 0
  %v252 = vadd.s32 %v242, %v246
  %v253 = vadd.s32 %v245, %v251
  %vm254 = vc.u32 %v252, %v248
  %v255 = vsel %vm254, 1, 0
  %v256 = vadd.s32 %v252, %v248
  %v257 = vadd.s32 %v253, %v255
  %v258 = vadd.s32 %v257, %v247
  %v259 = vadd.s32 %v258, %v249
  %v260 = vand.u32 %v237, 65535
  %v261 = vshrl.u32 %v237, 16
  %v262 = vand.u32 %v232, 65535
  %v263 = vshrl.u32 %v232, 16
  %v264 = vmul.u32 %v260, %v262
  %v265 = vmul.u32 %v260, %v263
  %v266 = vmul.u32 %v261, %v262
  %v267 = vmul.u32 %v261, %v263
  %v268 = vshll.u32 %v265, 16
  %v269 = vshrl.u32 %v265, 16
  %v270 = vshll.u32 %v266, 16
  %v271 = vshrl.u32 %v266, 16
  %vm272 = vc.u32 %v264, %v268
  %v273 = vsel %vm272, 1, 0
  %v274 = vadd.s32 %v264, %v268
  %v275 = vadd.s32 %v267, %v273
  %vm276 = vc.u32 %v274, %v270
  %v277 = vsel %vm276, 1, 0
  %v278 = vadd.s32 %v274, %v270
  %v279 = vadd.s32 %v275, %v277
  %v280 = vadd.s32 %v279, %v269
  %v281 = vadd.s32 %v280, %v271
  %v282 = vmul.u32 %v237, %v228
  %v283 = vadd.s32 %v259, %v278
  %vm284 = vc.u32 %v259, %v278
  %v285 = vadd.s32 %v281, 1
  %v286 = vsel %vm284, %v285, %v281
  %v287 = vadd.s32 %v282, %v286
  %v288 = vadd.s32 %v287, 536870912
  %v289 = vshrl.u32 %v288, 30
  %v290 = vshll.u32 %v289, 30
  %v291 = vsub.s32 %v287, %v290
  %vm292 = vcmp.lt.s32.totalorder %v291, 0
  %v293 = vsub.s32 0, %v291
  %v294 = vsel %vm292, %v293, %v291
  %v295 = vclz %v294
  %v296 = vsub.s32 %v295, 2
  %vm297 = vcmp.gt.s32.totalorder 0, %v296
  %v298 = vsel %vm297, 0, %v296
  %v299 = vsub.s32 32, %v298
  %v300 = vshll.u32 %v291, %v298
  %v301 = vshrl.u32 %v283, %v299
  %v302 = vor.u32 %v300, %v301
  %v303 = vsub.s32 4294967266, %v298
  %v304 = vadd.s32 %v303, 127
  %v305 = vshll.u32 %v304, 23
  %v306 = vor.u32 4788187, %v305
  %v307 = vand.u32 2147483647, %v306
  %v309 = vcvt.s32.f32 %v302
  %v310 = vmul.f32 %v309, %v307
  %v311 = vxor.u32 %v310, 2147483648
  %v312 = vsel %vm191, %v311, %v310
  %v313 = vsub.s32 4, %v289
  %v314 = vsel %vm191, %v313, %v289
  %v315 = vsel %vm190, %v33, %v312
  %v316 = vsel %vm190, 0, %v314
  %v317 = vmul.f32 %v315, %v315
  %v318 = vmul.f32 %v317, -0.001358992
  %v319 = vadd.f32 %v318, 0.041655596
  %v320 = vmul.f32 %v317, %v319
  %v321 = vadd.f32 %v320, -0.4999988
  %v322 = vmul.f32 %v317, %v321
  %v323 = vadd.f32 1.0, %v322
  %v324 = vmul.f32 %v315, %v315
  %v325 = vmul.f32 %v324, -0.00019511016
  %v326 = vadd.f32 %v325, 0.008332121
  %v327 = vmul.f32 %v324, %v326
  %v328 = vadd.f32 %v327, -0.16666654
  %v329 = vmul.f32 %v324, %v328
  %v330 = vadd.f32 %v329, 1.0
  %v331 = vmul.f32 %v330, %v315
  %vm332 = vweird.f32 %v33
  %v333 = vadd.s32 %v316, 3
  %v334 = vand.u32 %v333, 3
  %vm335 = vcmp.lt.s32.totalorder %v334, 2
  %vm336 = vcmp.eq.s32.totalorder %v334, 0
  %v337 = vxor.u32 %v331, 2147483648
  %v338 = vsel %vm336, %v323, %v337
  %vm339 = vcmp.eq.s32.totalorder %v334, 2
  %v340 = vxor.u32 %v323, 2147483648
  %v341 = vsel %vm339, %v340, %v331
  %v342 = vsel %vm335, %v338, %v341
  %v343 = vsel %vm332, nan, %v342
  %v344 = vmul.f32 %v188, %v29
  %v345 = vmul.f32 %v343, %v30
  %346 = vst [vmem:[%s2] sm:$0xff] %v344
  %347 = vst [vmem:[%s2 + $0x8] sm:$0xff] %v345
  // Predicated region
  $region6: #{sinegmoid.1} parent=0 // pred_check
    _
  $region7: #{sinegmoid.1} parent=0 // pred_check_branch
    %349 = sbr.rel (0) target = $region9
  $region8: #{sinegmoid.1} parent=0 // pred_region
    _
  $region9: #{sinegmoid.1} parent=0 // pred_fallthru
    _
  // Predicated region
  $region10: #{sinegmoid.1} parent=0 // pred_check
    _
  $region11: #{sinegmoid.1} parent=0 // pred_check_branch
    %351 = sbr.rel (0) target = $region13
  $region12: #{sinegmoid.1} parent=0 // pred_region
    _
  $region13: #{sinegmoid.1} parent=0 // pred_fallthru
    _

</llo_original>
